<compile_context>
chip_gen: v6e
topology: v6e:2x2x1
jax: 0.10.0
libtpu: 0.0.40
codegen_flags: <defaults>
</compile_context>

<pallas_src>
import jax
import jax.numpy as jnp
from jax.experimental import pallas as pl
from jax.experimental.pallas import tpu as pltpu

_TWO_PI = 2.0 * jnp.pi


def _gfp_kernel(x_ref, w_ref, out_ref):
    # x_ref:   (TB, 1)        f32
    # w_ref:   (1, half)      f32
    # out_ref: (TB, 2*half)   f32
    half = w_ref.shape[1]
    w_scaled = w_ref[...] * _TWO_PI            # (1, half): tiny, done per tile
    proj = x_ref[...] * w_scaled               # broadcast outer product (TB, half), VPU
    # Direct slice stores: sin in columns [:half], cos in columns [half:].
    out_ref[:, :half] = jnp.sin(proj)
    out_ref[:, half:] = jnp.cos(proj)


def _round_up(n: int, m: int) -> int:
    return ((n + m - 1) // m) * m


def gaussian_fourier_projection(x, W):
    """x: (batch,) (or squeezable to it); W: (embed_dim//2,) -> (batch, embed_dim)."""
    # Reproduce the PyTorch squeeze/unsqueeze glue in plain JAX.
    if x.ndim > 1:
        x = jnp.squeeze(x)
    elif x.ndim < 1:
        x = x[None]
    x = x.astype(jnp.float32)
    W = W.astype(jnp.float32)

    B = x.shape[0]
    half = W.shape[0]
    embed_dim = 2 * half

    # --- Tile size along batch: big enough to hide per-step overhead, small
    # enough that double-buffered tiles stay far under every chip's default
    # scoped VMEM.  Budget ~2 MiB per output tile -> TB rows (multiple of 8).
    out_tile_budget_bytes = 2 << 20
    tb_cap = max(8, (out_tile_budget_bytes // (embed_dim * 4)) // 8 * 8)
    TB = min(_round_up(B, 8), tb_cap, 4096)
    TB = max(TB, 8)

    # Pad batch to a multiple of TB (sin/cos of the zero-padded rows are
    # computed and discarded; cheaper than a tail guard for this tiny kernel).
    B_pad = _round_up(B, TB)
    if B_pad != B:
        x = jnp.zeros((B_pad,), jnp.float32).at[:B].set(x)

    x2d = x.reshape(B_pad, 1)
    w2d = W.reshape(1, half)

    grid = (B_pad // TB,)

    cost = pl.CostEstimate(
        flops=2 * B_pad * half,                       # the two multiplies
        transcendentals=B_pad * embed_dim,            # one sin/cos per output
        bytes_accessed=4 * (B_pad + half + B_pad * embed_dim),
    )

    out = pl.pallas_call(
        _gfp_kernel,
        out_shape=jax.ShapeDtypeStruct((B_pad, embed_dim), jnp.float32),
        grid=grid,
        in_specs=[
            pl.BlockSpec((TB, 1), lambda i: (i, 0)),
            pl.BlockSpec((1, half), lambda i: (0, 0)),
        ],
        out_specs=pl.BlockSpec((TB, embed_dim), lambda i: (i, 0)),
        compiler_params=pltpu.CompilerParams(
            dimension_semantics=("parallel",),
        ),
        cost_estimate=cost,
    )(x2d, w2d)

    if B_pad != B:
        out = out[:B]
    return out


if __name__ == "__main__":
    key = jax.random.PRNGKey(0)
    k_w, k_x = jax.random.split(key)

    embed_dim = 64
    scale = 2.0 * jnp.pi
    # Deterministic "buffer" W = randn(embed_dim // 2) * scale (done once at init,
    # matching the PyTorch module; the extra in-kernel *2pi matches forward()).
    W = jax.random.normal(k_w, (embed_dim // 2,), dtype=jnp.float32) * scale

    batch = 8
    x = jax.random.uniform(k_x, (batch,), dtype=jnp.float32)  # time vector

    out = gaussian_fourier_projection(x, W)
    out = jax.block_until_ready(out)

    # Reference check in plain JAX
    x_proj = x[:, None] * W[None, :] * 2.0 * jnp.pi
    ref = jnp.concatenate([jnp.sin(x_proj), jnp.cos(x_proj)], axis=-1)
    assert out.shape == (batch, embed_dim)
    assert jnp.allclose(out, ref, atol=1e-5, rtol=1e-5)

    print("KERNEL_OK")
</pallas_src>

<mosaic_0001>
module attributes {stable_mosaic.version = 11 : i64} {
  func.func @_gfp_kernel(%arg0: i32, %arg1: memref<8x1xf32, #tpu.memory_space<vmem>>, %arg2: memref<1x32xf32, #tpu.memory_space<vmem>>, %arg3: memref<8x64xf32, #tpu.memory_space<vmem>>) attributes {dimension_semantics = [#tpu.dimension_semantics<parallel>], iteration_bounds = array<i64: 1>, scalar_prefetch = 0 : i64, scratch_operands = 0 : i64, tpu.core_type = #tpu.core_type<tc>, window_params = [{transform_indices = @transform_0, window_bounds = array<i64: 8, 1>}, {pipeline_mode = #tpu.pipeline_mode<synchronous>, transform_indices = @transform_1, window_bounds = array<i64: 1, 32>}, {transform_indices = @transform_2, window_bounds = array<i64: 8, 64>}]} {
    %c0 = arith.constant 0 : index
    %c0_0 = arith.constant 0 : index
    %0 = vector.load %arg2[%c0, %c0_0] : memref<1x32xf32, #tpu.memory_space<vmem>>, vector<1x32xf32>
    %cst = arith.constant 6.28318548 : f32
    %1 = vector.broadcast %cst : f32 to vector<1x32xf32>
    %2 = arith.mulf %0, %1 : vector<1x32xf32>
    %c0_1 = arith.constant 0 : index
    %c0_2 = arith.constant 0 : index
    %3 = vector.load %arg1[%c0_1, %c0_2] : memref<8x1xf32, #tpu.memory_space<vmem>>, vector<8x1xf32>
    %4 = vector.broadcast %3 : vector<8x1xf32> to vector<8x32xf32>
    %5 = vector.broadcast %2 : vector<1x32xf32> to vector<8x32xf32>
    %6 = arith.mulf %4, %5 : vector<8x32xf32>
    %7 = math.sin %6 : vector<8x32xf32>
    %c0_3 = arith.constant 0 : index
    %c0_4 = arith.constant 0 : index
    %8 = vector.load %arg3[%c0_3, %c0_4] : memref<8x64xf32, #tpu.memory_space<vmem>>, vector<8x32xf32>
    tpu.vector_store %arg3[%c0_3, %c0_4], %7 {strides = array<i32>} : memref<8x64xf32, #tpu.memory_space<vmem>>, vector<8x32xf32>,
    %9 = math.cos %6 : vector<8x32xf32>
    %c0_5 = arith.constant 0 : index
    %c32 = arith.constant 32 : index
    %10 = vector.load %arg3[%c0_5, %c32] : memref<8x64xf32, #tpu.memory_space<vmem>>, vector<8x32xf32>
    tpu.vector_store %arg3[%c0_5, %c32], %9 {strides = array<i32>} : memref<8x64xf32, #tpu.memory_space<vmem>>, vector<8x32xf32>,
    return
  }
  func.func @transform_0(%arg0: i32) -> (i32, i32) {
    %c0_i32 = arith.constant 0 : i32
    %c0_i32_0 = arith.constant 0 : i32
    return %arg0, %c0_i32 : i32, i32
  }
  func.func @transform_1(%arg0: i32) -> (i32, i32) {
    %c0_i32 = arith.constant 0 : i32
    %c0_i32_0 = arith.constant 0 : i32
    %c0_i32_1 = arith.constant 0 : i32
    return %c0_i32, %c0_i32_0 : i32, i32
  }
  func.func @transform_2(%arg0: i32) -> (i32, i32) {
    %c0_i32 = arith.constant 0 : i32
    %c0_i32_0 = arith.constant 0 : i32
    return %arg0, %c0_i32 : i32, i32
  }
}

</mosaic_0001>

<llo_original>
// kernel: tpu_custom_call.1
$region0: #{tpu_custom_call.1}
  #allocation0 [shape = 'u32[]', space=smem, size = 0x4, offset = 0x4, fixed_abs, tag = 'smem constant byte address 0x4 - core index']
  #allocation1 [shape = 'u32[144,128]{1,0:T(1,128)}', space=vmem, size = 0x12000, scoped, tag = 'internal scratch']
  %s0 = inlined_call_operand.vmem [shape: f32[8,1], index: 0, kind: input, shape index: {}]
  %s1 = inlined_call_operand.vmem [shape: f32[1,32], index: 1, kind: input, shape index: {}]
  %s2 = inlined_call_operand.hbm [shape: f32[8,64], index: 2, kind: output, shape index: {}]
  %s3 = sld [smem:[#allocation0]]
  $region18: #{tpu_custom_call.1} parent=0
    _
  %s5 = ssub.s32 1, %s3
  %s6 = scalar_select 0, %s5, %s3
  $region1: #{tpu_custom_call.1} parent=0
    #allocation2 [shape = 'u8[4096]{0}', space=vmem, size = 0x1000, scoped, tag = 'output window, operand 0, single buffered']
    #allocation3 [shape = 's32[1]{0}', space=sflag, size = 0x4, scoped, tag = 'scoped memory for tpu_custom_call.1']
    %7 = vsyncpa [#allocation3], 0
    // Predicated region
    $region2: #{tpu_custom_call.1} parent=1 // pred_check
      _
    $region3: #{tpu_custom_call.1} parent=1 // pred_check_branch
      %9 = sbr.rel (0) target = $region5
    $region4: #{tpu_custom_call.1} parent=1 // pred_region
      _
    $region5: #{tpu_custom_call.1} parent=1 // pred_fallthru
      _
    // Predicated region
    $region6: #{tpu_custom_call.1} parent=1 // pred_check
      _
    $region7: #{tpu_custom_call.1} parent=1 // pred_check_branch
      %11 = sbr.rel (0) target = $region9
    $region8: #{tpu_custom_call.1} parent=1 // pred_region
      _
    $region9: #{tpu_custom_call.1} parent=1 // pred_fallthru
      _
    %v12 = vld [vmem:[%s1] sm:$0x1]
    %v13 = vmul.f32 %v12, 6.2831855
    %v14 = vld [vmem:[%s0] sm:$0xff]
    %16 = vset.pattern.permute.xlu0 0
    %17 = vperm.xlu0 %16, %v14
    %v18 = vpop.permute.xlu0 %17
    %v21 = vlaneseq
    %v22 = vshrl.u32 %v21, 7
    %v23 = vsub.s32 0, %v22
    %v24 = vrot.slane %v13, %v23
    %v26 = vmul.f32 %v18, %v24
    %v27 = vand.u32 2147483647, %v26
    %vm28 = vcmp.le.f32.partialorder %v27, 0.7853982
    %vm29 = vcmp.lt.s32.totalorder %v26, 0
    %v30 = vand.u32 %v26, 2139095040
    %v31 = vshrl.u32 %v30, 23
    %v32 = vsub.s32 %v31, 127
    %v33 = vand.u32 2147483647, %v26
    %v34 = vand.u32 %v33, 8388607
    %v35 = vor.u32 %v34, 8388608
    %v36 = vsub.s32 0, %v35
    %v37 = vadd.s32 %v32, 1
    %vm38 = vcmp.gt.s32.totalorder %v37, 0
    %v39 = vsel %vm38, %v37, 0
    %v40 = vshrl.u32 %v39, 5
    %v41 = vand.u32 %v39, 31
    %v42 = vsub.s32 32, %v41
    %v43 = vshrl.u32 683565275, %v42
    %v44 = vshll.u32 683565275, %v41
    %v45 = vshrl.u32 2475754826, %v42
    %v46 = vor.u32 %v44, %v45
    %v47 = vshll.u32 2475754826, %v41
    %v48 = vshrl.u32 2131351028, %v42
    %v49 = vor.u32 %v47, %v48
    %v50 = vshll.u32 2131351028, %v41
    %v51 = vshrl.u32 2102212464, %v42
    %v52 = vor.u32 %v50, %v51
    %v53 = vshll.u32 2102212464, %v41
    %v54 = vshrl.u32 920167782, %v42
    %v55 = vor.u32 %v53, %v54
    %v56 = vshll.u32 920167782, %v41
    %v57 = vshrl.u32 1326507024, %v42
    %v58 = vor.u32 %v56, %v57
    %vm59 = vcmp.lt.s32.totalorder %v40, 1
    %vm60 = vcmp.lt.s32.totalorder %v40, 2
    %vm61 = vcmp.lt.s32.totalorder %v40, 3
    %vm62 = vcmp.lt.s32.totalorder %v40, 4
    %v63 = vsel %vm59, %v43, %v46
    %v64 = vsel %vm62, %v52, 2102212464
    %v65 = vsel %vm61, %v49, %v64
    %v66 = vsel %vm60, %v63, %v65
    %v67 = vsel %vm59, %v46, %v49
    %v68 = vsel %vm62, %v55, 920167782
    %v69 = vsel %vm61, %v52, %v68
    %v70 = vsel %vm60, %v67, %v69
    %v71 = vsel %vm59, %v49, %v52
    %v72 = vsel %vm62, %v58, 1326507024
    %v73 = vsel %vm61, %v55, %v72
    %v74 = vsel %vm60, %v71, %v73
    %v75 = vshll.u32 %v35, 8
    %v76 = vmul.u32.u64.compose %v75, %v74
    %v77 = vextract.low.u32 %v76
    %v78 = vextract.high.u32 %v76
    %v79 = vmul.u32.u64.compose %v75, %v70
    %v80 = vextract.low.u32 %v79
    %v81 = vextract.high.u32 %v79
    %v82 = vmul.u32 %v75, %v66
    %v83 = vadd.s32 %v78, %v80
    %vm84 = vc.u32 %v78, %v80
    %v85 = vadd.s32 %v81, 1
    %v86 = vsel %vm84, %v85, %v81
    %v87 = vadd.s32 %v82, %v86
    %v88 = vadd.s32 %v87, 536870912
    %v89 = vshrl.u32 %v88, 30
    %v90 = vshll.u32 %v89, 30
    %v91 = vsub.s32 %v87, %v90
    %vm92 = vcmp.lt.s32.totalorder %v91, 0
    %v93 = vsub.s32 0, %v91
    %v94 = vsel %vm92, %v93, %v91
    %v95 = vclz %v94
    %v96 = vsub.s32 %v95, 2
    %vm97 = vcmp.gt.s32.totalorder 0, %v96
    %v98 = vsel %vm97, 0, %v96
    %v99 = vsub.s32 32, %v98
    %v100 = vshll.u32 %v91, %v98
    %v101 = vshrl.u32 %v83, %v99
    %v102 = vor.u32 %v100, %v101
    %v103 = vsub.s32 4294967266, %v98
    %v104 = vadd.s32 %v103, 127
    %v105 = vshll.u32 %v104, 23
    %v106 = vor.u32 4788187, %v105
    %v107 = vand.u32 2147483647, %v106
    %v109 = vcvt.s32.f32 %v102
    %v110 = vmul.f32 %v109, %v107
    %v111 = vxor.u32 %v110, 2147483648
    %v112 = vsel %vm29, %v111, %v110
    %v113 = vsub.s32 4, %v89
    %v114 = vsel %vm29, %v113, %v89
    %v115 = vsel %vm28, %v26, %v112
    %v116 = vsel %vm28, 0, %v114
    %v117 = vcosq.f32.pop %v115
    %v118 = vsinq.f32.pop %v115
    %vm119 = vweird.f32 %v26
    %v120 = vadd.s32 %v116, 3
    %v121 = vand.u32 %v120, 3
    %vm122 = vcmp.lt.s32.totalorder %v121, 2
    %vm123 = vcmp.eq.s32.totalorder %v121, 0
    %v124 = vxor.u32 %v118, 2147483648
    %v125 = vsel %vm123, %v117, %v124
    %vm126 = vcmp.eq.s32.totalorder %v121, 2
    %v127 = vxor.u32 %v117, 2147483648
    %v128 = vsel %vm126, %v127, %v118
    %v129 = vsel %vm122, %v125, %v128
    %v130 = vsel %vm119, nan, %v129
    %vm131 = vcmask 261120
    %132 = vst.msk [vmem:[#allocation2] sm:$0xff] %vm131, %v130
    %v133 = vand.u32 2147483647, %v26
    %vm134 = vcmp.le.f32.partialorder %v133, 0.7853982
    %vm135 = vcmp.lt.s32.totalorder %v26, 0
    %v136 = vand.u32 %v26, 2139095040
    %v137 = vshrl.u32 %v136, 23
    %v138 = vsub.s32 %v137, 127
    %v139 = vand.u32 2147483647, %v26
    %v140 = vand.u32 %v139, 8388607
    %v141 = vor.u32 %v140, 8388608
    %v142 = vsub.s32 0, %v141
    %v143 = vadd.s32 %v138, 1
    %vm144 = vcmp.gt.s32.totalorder %v143, 0
    %v145 = vsel %vm144, %v143, 0
    %v146 = vshrl.u32 %v145, 5
    %v147 = vand.u32 %v145, 31
    %v148 = vsub.s32 32, %v147
    %v149 = vshrl.u32 683565275, %v148
    %v150 = vshll.u32 683565275, %v147
    %v151 = vshrl.u32 2475754826, %v148
    %v152 = vor.u32 %v150, %v151
    %v153 = vshll.u32 2475754826, %v147
    %v154 = vshrl.u32 2131351028, %v148
    %v155 = vor.u32 %v153, %v154
    %v156 = vshll.u32 2131351028, %v147
    %v157 = vshrl.u32 2102212464, %v148
    %v158 = vor.u32 %v156, %v157
    %v159 = vshll.u32 2102212464, %v147
    %v160 = vshrl.u32 920167782, %v148
    %v161 = vor.u32 %v159, %v160
    %v162 = vshll.u32 920167782, %v147
    %v163 = vshrl.u32 1326507024, %v148
    %v164 = vor.u32 %v162, %v163
    %vm165 = vcmp.lt.s32.totalorder %v146, 1
    %vm166 = vcmp.lt.s32.totalorder %v146, 2
    %vm167 = vcmp.lt.s32.totalorder %v146, 3
    %vm168 = vcmp.lt.s32.totalorder %v146, 4
    %v169 = vsel %vm165, %v149, %v152
    %v170 = vsel %vm168, %v158, 2102212464
    %v171 = vsel %vm167, %v155, %v170
    %v172 = vsel %vm166, %v169, %v171
    %v173 = vsel %vm165, %v152, %v155
    %v174 = vsel %vm168, %v161, 920167782
    %v175 = vsel %vm167, %v158, %v174
    %v176 = vsel %vm166, %v173, %v175
    %v177 = vsel %vm165, %v155, %v158
    %v178 = vsel %vm168, %v164, 1326507024
    %v179 = vsel %vm167, %v161, %v178
    %v180 = vsel %vm166, %v177, %v179
    %v181 = vshll.u32 %v141, 8
    %v182 = vmul.u32.u64.compose %v181, %v180
    %v183 = vextract.low.u32 %v182
    %v184 = vextract.high.u32 %v182
    %v185 = vmul.u32.u64.compose %v181, %v176
    %v186 = vextract.low.u32 %v185
    %v187 = vextract.high.u32 %v185
    %v188 = vmul.u32 %v181, %v172
    %v189 = vadd.s32 %v184, %v186
    %vm190 = vc.u32 %v184, %v186
    %v191 = vadd.s32 %v187, 1
    %v192 = vsel %vm190, %v191, %v187
    %v193 = vadd.s32 %v188, %v192
    %v194 = vadd.s32 %v193, 536870912
    %v195 = vshrl.u32 %v194, 30
    %v196 = vshll.u32 %v195, 30
    %v197 = vsub.s32 %v193, %v196
    %vm198 = vcmp.lt.s32.totalorder %v197, 0
    %v199 = vsub.s32 0, %v197
    %v200 = vsel %vm198, %v199, %v197
    %v201 = vclz %v200
    %v202 = vsub.s32 %v201, 2
    %vm203 = vcmp.gt.s32.totalorder 0, %v202
    %v204 = vsel %vm203, 0, %v202
    %v205 = vsub.s32 32, %v204
    %v206 = vshll.u32 %v197, %v204
    %v207 = vshrl.u32 %v189, %v205
    %v208 = vor.u32 %v206, %v207
    %v209 = vsub.s32 4294967266, %v204
    %v210 = vadd.s32 %v209, 127
    %v211 = vshll.u32 %v210, 23
    %v212 = vor.u32 4788187, %v211
    %v213 = vand.u32 2147483647, %v212
    %v215 = vcvt.s32.f32 %v208
    %v216 = vmul.f32 %v215, %v213
    %v217 = vxor.u32 %v216, 2147483648
    %v218 = vsel %vm135, %v217, %v216
    %v219 = vsub.s32 4, %v195
    %v220 = vsel %vm135, %v219, %v195
    %v221 = vsel %vm134, %v26, %v218
    %v222 = vsel %vm134, 0, %v220
    %v223 = vcosq.f32.pop %v221
    %v224 = vsinq.f32.pop %v221
    %vm225 = vweird.f32 %v26
    %v226 = vand.u32 %v222, 3
    %vm227 = vcmp.lt.s32.totalorder %v226, 2
    %vm228 = vcmp.eq.s32.totalorder %v226, 0
    %v229 = vxor.u32 %v224, 2147483648
    %v230 = vsel %vm228, %v223, %v229
    %vm231 = vcmp.eq.s32.totalorder %v226, 2
    %v232 = vxor.u32 %v223, 2147483648
    %v233 = vsel %vm231, %v232, %v224
    %v234 = vsel %vm227, %v230, %v233
    %v235 = vsel %vm225, nan, %v234
    %237 = vrot.lane.b32.xlu0 %v235, 32
    %v238 = vpop.permute.xlu0 %237
    %vm240 = vcmask 523520
    %241 = vst.msk [vmem:[#allocation2] sm:$0xff] %vm240, %v238
    // Predicated region
    $region10: #{tpu_custom_call.1} parent=1 // pred_check
      _
    $region11: #{tpu_custom_call.1} parent=1 // pred_check_branch
      %243 = sbr.rel (0) target = $region13
    $region12: #{tpu_custom_call.1} parent=1 // pred_region
      %s245 = ssub.s32 128, 128
      %246 = vsyncadd [#allocation3], %s245
      %s248 = sshll.u32 [#allocation2], 4
      %s249 = int_to_ptr.vmem [resolvable:$true] %s248
      %251 = dma.vmem_to_hbm [thread:$0]  %s249, 128, %s2, [#allocation3]
    $region13: #{tpu_custom_call.1} parent=1 // pred_fallthru
      _
    // Predicated region
    $region14: #{tpu_custom_call.1} parent=1 // pred_check
      _
    $region15: #{tpu_custom_call.1} parent=1 // pred_check_branch
      %253 = sbr.rel (0) target = $region17
    $region16: #{tpu_custom_call.1} parent=1 // pred_region
      %254 = dma.done [#allocation3], 128
    $region17: #{tpu_custom_call.1} parent=1 // pred_fallthru
      _
    %255 = vsyncpa [#allocation3], 1

</llo_original>
